<compile_context>
chip_gen: v7x
topology: tpu7x:2x2x1
jax: 0.10.0
libtpu: 0.0.40
codegen_flags: <defaults>
</compile_context>

<pallas_src>
import functools

import jax
import jax.numpy as jnp
from jax import lax
from jax.experimental import pallas as pl
from jax.experimental.pallas import tpu as pltpu


def _round_up(x, m):
    return ((x + m - 1) // m) * m


# ----------------------------------------------------------------------------
# Fully fused kernel:
#   normalized adjacency + fc_in + num_layers x relu(A @ X @ W_l + b_l) + fc_out
# ----------------------------------------------------------------------------
def _fused_hypergcn_kernel(x_ref, h_ref, w_in_ref, b_in_ref,
                           w_l_ref, b_l_ref, w_out_ref, b_out_ref,
                           o_ref, *, num_layers, symmetric):
    # ---- one-time normalized hypergraph adjacency (stays in VMEM/vregs) ----
    h = h_ref[...]                                                  # [N, E]
    deg_v = jnp.maximum(jnp.sum(h, axis=1, keepdims=True), 1.0)     # [N, 1]
    deg_e = jnp.maximum(jnp.sum(h, axis=0, keepdims=True), 1.0)     # [1, E]
    inv_de = 1.0 / deg_e
    if symmetric:
        dv = 1.0 / jnp.sqrt(deg_v)            # Dv^{-1/2}
        h_lhs = h * dv * inv_de               # Dv^{-1/2} H De^{-1}
        h_rhs = h * dv                        # Dv^{-1/2} H  (transposed below)
    else:
        h_lhs = h * (1.0 / deg_v) * inv_de    # Dv^{-1} H De^{-1}
        h_rhs = h
    # A = h_lhs @ h_rhs^T  (contract the hyperedge / lane axis, no transpose op)
    a = lax.dot_general(h_lhs, h_rhs, (((1,), (1,)), ((), ())),
                        preferred_element_type=jnp.float32)         # [N, N]

    # ---- fc_in (no nonlinearity after it in the reference model) ----
    x = jnp.dot(x_ref[...], w_in_ref[...],
                preferred_element_type=jnp.float32) + b_in_ref[...]

    # ---- hypergraph conv layers; dropout p=0.0 is a no-op ----
    # Static Python loop: activation never leaves the chip between layers.
    for l in range(num_layers):
        x = jnp.dot(a, x, preferred_element_type=jnp.float32)
        x = jnp.dot(x, w_l_ref[l],
                    preferred_element_type=jnp.float32) + b_l_ref[l]
        x = jnp.maximum(x, 0.0)

    # ---- fc_out, lane-dense padded store (zero cols sliced off outside) ----
    y = jnp.dot(x, w_out_ref[...],
                preferred_element_type=jnp.float32) + b_out_ref[...]
    o_ref[...] = y.astype(o_ref.dtype)


# ----------------------------------------------------------------------------
# Parameter setup (matches PyTorch nn.Linear defaults) + wrapper
# ----------------------------------------------------------------------------
def init_linear_params(key, fan_in, fan_out):
    # PyTorch nn.Linear default init: U(-1/sqrt(fan_in), 1/sqrt(fan_in))
    kw, kb = jax.random.split(key)
    bound = 1.0 / jnp.sqrt(float(fan_in))
    w = jax.random.uniform(kw, (fan_in, fan_out), jnp.float32, -bound, bound)
    b = jax.random.uniform(kb, (fan_out,), jnp.float32, -bound, bound)
    return w, b


def init_hypergcn_params(key, input_dim, hidden_dim, output_dim, num_layers):
    keys = jax.random.split(key, num_layers + 2)
    params = {"fc_in": init_linear_params(keys[0], input_dim, hidden_dim)}
    params["layers"] = [
        init_linear_params(keys[1 + l], hidden_dim, hidden_dim)
        for l in range(num_layers)
    ]
    params["fc_out"] = init_linear_params(keys[-1], hidden_dim, output_dim)
    return params


def hypergcn_forward(params, x, H, symmetric_norm=True):
    """x: [N, input_dim] node features, H: [N, E] incidence matrix."""
    x = x.astype(jnp.float32)
    H = H.astype(jnp.float32)
    N, Din = x.shape
    _, E = H.shape

    w_in, b_in = params["fc_in"]
    Hd = w_in.shape[1]
    num_layers = len(params["layers"])
    w_layers = jnp.stack([w for (w, _) in params["layers"]])               # [L,Hd,Hd]
    b_layers = jnp.stack([b.reshape(1, Hd) for (_, b) in params["layers"]])  # [L,1,Hd]
    w_out, b_out = params["fc_out"]
    Dout = w_out.shape[1]
    b_in2 = b_in.reshape(1, Hd)

    # pad fc_out columns so the kernel's only HBM store is lane-dense
    Dout_pad = _round_up(Dout, 128)
    w_out_p = jnp.zeros((Hd, Dout_pad), jnp.float32).at[:, :Dout].set(w_out)
    b_out_p = jnp.zeros((1, Dout_pad), jnp.float32).at[:, :Dout].set(
        b_out.reshape(1, Dout))

    flops = 2.0 * (N * E * N                               # adjacency (one-time)
                   + N * Din * Hd                          # fc_in
                   + num_layers * (N * N * Hd + N * Hd * Hd)
                   + N * Hd * Dout_pad)                    # fc_out
    bytes_accessed = 4 * (x.size + H.size + w_in.size + b_in2.size
                          + w_layers.size + b_layers.size
                          + w_out_p.size + b_out_p.size + N * Dout_pad)

    # TODO(synk): len_readout / EntropyLinear and use_attention branches not
    #             implemented (external deps, off by default in the module).
    y_pad = pl.pallas_call(
        functools.partial(_fused_hypergcn_kernel,
                          num_layers=num_layers, symmetric=symmetric_norm),
        out_shape=jax.ShapeDtypeStruct((N, Dout_pad), jnp.float32),
        grid=(1,),
        in_specs=[
            pl.BlockSpec((N, Din), lambda i: (0, 0)),
            pl.BlockSpec((N, E), lambda i: (0, 0)),
            pl.BlockSpec((Din, Hd), lambda i: (0, 0)),
            pl.BlockSpec((1, Hd), lambda i: (0, 0)),
            pl.BlockSpec((num_layers, Hd, Hd), lambda i: (0, 0, 0)),
            pl.BlockSpec((num_layers, 1, Hd), lambda i: (0, 0, 0)),
            pl.BlockSpec((Hd, Dout_pad), lambda i: (0, 0)),
            pl.BlockSpec((1, Dout_pad), lambda i: (0, 0)),
        ],
        out_specs=pl.BlockSpec((N, Dout_pad), lambda i: (0, 0)),
        compiler_params=pltpu.CompilerParams(
            dimension_semantics=("arbitrary",)),
        cost_estimate=pl.CostEstimate(
            flops=int(flops), transcendentals=int(N),
            bytes_accessed=int(bytes_accessed)),
    )(x, H, w_in, b_in2, w_layers, b_layers, w_out_p, b_out_p)

    return y_pad[:, :Dout]


# ----------------------------------------------------------------------------
if __name__ == "__main__":
    # small, deterministic example problem
    N, E = 16, 8          # nodes, hyperedges
    input_dim = 8
    hidden_dim = 32
    output_dim = 4
    num_layers = 2

    key = jax.random.PRNGKey(0)
    k_x, k_H, k_params = jax.random.split(key, 3)

    x = jax.random.normal(k_x, (N, input_dim), jnp.float32)
    # random binary incidence matrix; make sure every node touches edge 0 so
    # there are no isolated nodes
    H = (jax.random.uniform(k_H, (N, E)) < 0.4).astype(jnp.float32)
    H = H.at[:, 0].set(1.0)

    params = init_hypergcn_params(k_params, input_dim, hidden_dim,
                                  output_dim, num_layers)

    fwd = jax.jit(functools.partial(hypergcn_forward, symmetric_norm=True))
    y = fwd(params, x, H)
    y = jax.block_until_ready(y)
    assert y.shape == (N, output_dim)
    assert jnp.all(jnp.isfinite(y))
    print("KERNEL_OK")
</pallas_src>

<mosaic_0001>
module attributes {stable_mosaic.version = 11 : i64} {
  func.func @_fused_hypergcn_kernel(%arg0: i32, %arg1: memref<16x8xf32, #tpu.memory_space<vmem>>, %arg2: memref<16x8xf32, #tpu.memory_space<vmem>>, %arg3: memref<8x32xf32, #tpu.memory_space<vmem>>, %arg4: memref<1x32xf32, #tpu.memory_space<vmem>>, %arg5: memref<2x32x32xf32, #tpu.memory_space<vmem>>, %arg6: memref<2x1x32xf32, #tpu.memory_space<vmem>>, %arg7: memref<32x128xf32, #tpu.memory_space<vmem>>, %arg8: memref<1x128xf32, #tpu.memory_space<vmem>>, %arg9: memref<16x128xf32, #tpu.memory_space<vmem>>) attributes {dimension_semantics = [#tpu.dimension_semantics<arbitrary>], iteration_bounds = array<i64: 1>, scalar_prefetch = 0 : i64, scratch_operands = 0 : i64, tpu.core_type = #tpu.core_type<tc>, window_params = [{pipeline_mode = #tpu.pipeline_mode<synchronous>, transform_indices = @transform_0, window_bounds = array<i64: 16, 8>}, {pipeline_mode = #tpu.pipeline_mode<synchronous>, transform_indices = @transform_1, window_bounds = array<i64: 16, 8>}, {pipeline_mode = #tpu.pipeline_mode<synchronous>, transform_indices = @transform_2, window_bounds = array<i64: 8, 32>}, {pipeline_mode = #tpu.pipeline_mode<synchronous>, transform_indices = @transform_3, window_bounds = array<i64: 1, 32>}, {pipeline_mode = #tpu.pipeline_mode<synchronous>, transform_indices = @transform_4, window_bounds = array<i64: 2, 32, 32>}, {pipeline_mode = #tpu.pipeline_mode<synchronous>, transform_indices = @transform_5, window_bounds = array<i64: 2, 1, 32>}, {pipeline_mode = #tpu.pipeline_mode<synchronous>, transform_indices = @transform_6, window_bounds = array<i64: 32, 128>}, {pipeline_mode = #tpu.pipeline_mode<synchronous>, transform_indices = @transform_7, window_bounds = array<i64: 1, 128>}, {pipeline_mode = #tpu.pipeline_mode<synchronous>, transform_indices = @transform_8, window_bounds = array<i64: 16, 128>}]} {
    %c0 = arith.constant 0 : index
    %c0_0 = arith.constant 0 : index
    %0 = vector.load %arg2[%c0, %c0_0] : memref<16x8xf32, #tpu.memory_space<vmem>>, vector<16x8xf32>
    %cst = arith.constant dense<0.000000e+00> : vector<16xf32>
    %1 = vector.multi_reduction <add>, %0, %cst [1] : vector<16x8xf32> to vector<16xf32>
    %2 = vector.shape_cast %1 : vector<16xf32> to vector<16x1xf32>
    %cst_1 = arith.constant 1.000000e+00 : f32
    %3 = vector.broadcast %cst_1 : f32 to vector<16x1xf32>
    %4 = arith.maximumf %2, %3 : vector<16x1xf32>
    %cst_2 = arith.constant dense<0.000000e+00> : vector<8xf32>
    %5 = vector.multi_reduction <add>, %0, %cst_2 [0] : vector<16x8xf32> to vector<8xf32>
    %6 = vector.shape_cast %5 : vector<8xf32> to vector<1x8xf32>
    %cst_3 = arith.constant 1.000000e+00 : f32
    %7 = vector.broadcast %cst_3 : f32 to vector<1x8xf32>
    %8 = arith.maximumf %6, %7 : vector<1x8xf32>
    %cst_4 = arith.constant 1.000000e+00 : f32
    %9 = vector.broadcast %cst_4 : f32 to vector<1x8xf32>
    %10 = arith.divf %9, %8 : vector<1x8xf32>
    %11 = math.sqrt %4 : vector<16x1xf32>
    %cst_5 = arith.constant 1.000000e+00 : f32
    %12 = vector.broadcast %cst_5 : f32 to vector<16x1xf32>
    %13 = arith.divf %12, %11 : vector<16x1xf32>
    %14 = vector.broadcast %13 : vector<16x1xf32> to vector<16x8xf32>
    %15 = arith.mulf %0, %14 : vector<16x8xf32>
    %16 = vector.broadcast %10 : vector<1x8xf32> to vector<16x8xf32>
    %17 = arith.mulf %15, %16 : vector<16x8xf32>
    %18 = vector.broadcast %13 : vector<16x1xf32> to vector<16x8xf32>
    %19 = arith.mulf %0, %18 : vector<16x8xf32>
    %cst_6 = arith.constant dense<0.000000e+00> : vector<16x16xf32>
    %20 = tpu.matmul %17, %19, %cst_6 {dimension_numbers = #tpu.dot_dimension_numbers<[1], [1], [0], [0], [0, 0, 1, 0], [], []>} : vector<16x8xf32>, vector<16x8xf32>, vector<16x16xf32> -> vector<16x16xf32>
    %c0_7 = arith.constant 0 : index
    %c0_8 = arith.constant 0 : index
    %21 = vector.load %arg1[%c0_7, %c0_8] : memref<16x8xf32, #tpu.memory_space<vmem>>, vector<16x8xf32>
    %c0_9 = arith.constant 0 : index
    %c0_10 = arith.constant 0 : index
    %22 = vector.load %arg3[%c0_9, %c0_10] : memref<8x32xf32, #tpu.memory_space<vmem>>, vector<8x32xf32>
    %cst_11 = arith.constant dense<0.000000e+00> : vector<16x32xf32>
    %23 = tpu.matmul %21, %22, %cst_11 {dimension_numbers = #tpu.dot_dimension_numbers<[1], [0], [0], [1], [0, 0, 1, 1], [], []>} : vector<16x8xf32>, vector<8x32xf32>, vector<16x32xf32> -> vector<16x32xf32>
    %c0_12 = arith.constant 0 : index
    %c0_13 = arith.constant 0 : index
    %24 = vector.load %arg4[%c0_12, %c0_13] : memref<1x32xf32, #tpu.memory_space<vmem>>, vector<1x32xf32>
    %25 = vector.broadcast %24 : vector<1x32xf32> to vector<16x32xf32>
    %26 = arith.addf %23, %25 : vector<16x32xf32>
    %cst_14 = arith.constant dense<0.000000e+00> : vector<16x32xf32>
    %27 = tpu.matmul %20, %26, %cst_14 {dimension_numbers = #tpu.dot_dimension_numbers<[1], [0], [0], [1], [0, 0, 1, 1], [], []>} : vector<16x16xf32>, vector<16x32xf32>, vector<16x32xf32> -> vector<16x32xf32>
    %c0_15 = arith.constant 0 : index
    %c0_16 = arith.constant 0 : index
    %c0_17 = arith.constant 0 : index
    %28 = vector.load %arg5[%c0_15, %c0_16, %c0_17] : memref<2x32x32xf32, #tpu.memory_space<vmem>>, vector<1x32x32xf32>
    %29 = vector.shape_cast %28 : vector<1x32x32xf32> to vector<32x32xf32>
    %cst_18 = arith.constant dense<0.000000e+00> : vector<16x32xf32>
    %30 = tpu.matmul %27, %29, %cst_18 {dimension_numbers = #tpu.dot_dimension_numbers<[1], [0], [0], [1], [0, 0, 1, 1], [], []>} : vector<16x32xf32>, vector<32x32xf32>, vector<16x32xf32> -> vector<16x32xf32>
    %c0_19 = arith.constant 0 : index
    %c0_20 = arith.constant 0 : index
    %c0_21 = arith.constant 0 : index
    %31 = vector.load %arg6[%c0_19, %c0_20, %c0_21] : memref<2x1x32xf32, #tpu.memory_space<vmem>>, vector<1x1x32xf32>
    %32 = vector.shape_cast %31 : vector<1x1x32xf32> to vector<1x32xf32>
    %33 = vector.broadcast %32 : vector<1x32xf32> to vector<16x32xf32>
    %34 = arith.addf %30, %33 : vector<16x32xf32>
    %cst_22 = arith.constant 0.000000e+00 : f32
    %35 = vector.broadcast %cst_22 : f32 to vector<16x32xf32>
    %36 = arith.maximumf %34, %35 : vector<16x32xf32>
    %cst_23 = arith.constant dense<0.000000e+00> : vector<16x32xf32>
    %37 = tpu.matmul %20, %36, %cst_23 {dimension_numbers = #tpu.dot_dimension_numbers<[1], [0], [0], [1], [0, 0, 1, 1], [], []>} : vector<16x16xf32>, vector<16x32xf32>, vector<16x32xf32> -> vector<16x32xf32>
    %c1 = arith.constant 1 : index
    %c0_24 = arith.constant 0 : index
    %c0_25 = arith.constant 0 : index
    %38 = vector.load %arg5[%c1, %c0_24, %c0_25] : memref<2x32x32xf32, #tpu.memory_space<vmem>>, vector<1x32x32xf32>
    %39 = vector.shape_cast %38 : vector<1x32x32xf32> to vector<32x32xf32>
    %cst_26 = arith.constant dense<0.000000e+00> : vector<16x32xf32>
    %40 = tpu.matmul %37, %39, %cst_26 {dimension_numbers = #tpu.dot_dimension_numbers<[1], [0], [0], [1], [0, 0, 1, 1], [], []>} : vector<16x32xf32>, vector<32x32xf32>, vector<16x32xf32> -> vector<16x32xf32>
    %c1_27 = arith.constant 1 : index
    %c0_28 = arith.constant 0 : index
    %c0_29 = arith.constant 0 : index
    %41 = vector.load %arg6[%c1_27, %c0_28, %c0_29] : memref<2x1x32xf32, #tpu.memory_space<vmem>>, vector<1x1x32xf32>
    %42 = vector.shape_cast %41 : vector<1x1x32xf32> to vector<1x32xf32>
    %43 = vector.broadcast %42 : vector<1x32xf32> to vector<16x32xf32>
    %44 = arith.addf %40, %43 : vector<16x32xf32>
    %cst_30 = arith.constant 0.000000e+00 : f32
    %45 = vector.broadcast %cst_30 : f32 to vector<16x32xf32>
    %46 = arith.maximumf %44, %45 : vector<16x32xf32>
    %c0_31 = arith.constant 0 : index
    %c0_32 = arith.constant 0 : index
    %47 = vector.load %arg7[%c0_31, %c0_32] : memref<32x128xf32, #tpu.memory_space<vmem>>, vector<32x128xf32>
    %cst_33 = arith.constant dense<0.000000e+00> : vector<16x128xf32>
    %48 = tpu.matmul %46, %47, %cst_33 {dimension_numbers = #tpu.dot_dimension_numbers<[1], [0], [0], [1], [0, 0, 1, 1], [], []>} : vector<16x32xf32>, vector<32x128xf32>, vector<16x128xf32> -> vector<16x128xf32>
    %c0_34 = arith.constant 0 : index
    %c0_35 = arith.constant 0 : index
    %49 = vector.load %arg8[%c0_34, %c0_35] : memref<1x128xf32, #tpu.memory_space<vmem>>, vector<1x128xf32>
    %50 = vector.broadcast %49 : vector<1x128xf32> to vector<16x128xf32>
    %51 = arith.addf %48, %50 : vector<16x128xf32>
    %c0_36 = arith.constant 0 : index
    %c0_37 = arith.constant 0 : index
    %52 = vector.load %arg9[%c0_36, %c0_37] : memref<16x128xf32, #tpu.memory_space<vmem>>, vector<16x128xf32>
    tpu.vector_store %arg9[%c0_36, %c0_37], %51 {strides = array<i32>} : memref<16x128xf32, #tpu.memory_space<vmem>>, vector<16x128xf32>,
    return
  }
  func.func @transform_0(%arg0: i32) -> (i32, i32) {
    %c0_i32 = arith.constant 0 : i32
    %c0_i32_0 = arith.constant 0 : i32
    %c0_i32_1 = arith.constant 0 : i32
    return %c0_i32, %c0_i32_0 : i32, i32
  }
  func.func @transform_1(%arg0: i32) -> (i32, i32) {
    %c0_i32 = arith.constant 0 : i32
    %c0_i32_0 = arith.constant 0 : i32
    %c0_i32_1 = arith.constant 0 : i32
    return %c0_i32, %c0_i32_0 : i32, i32
  }
  func.func @transform_2(%arg0: i32) -> (i32, i32) {
    %c0_i32 = arith.constant 0 : i32
    %c0_i32_0 = arith.constant 0 : i32
    %c0_i32_1 = arith.constant 0 : i32
    return %c0_i32, %c0_i32_0 : i32, i32
  }
  func.func @transform_3(%arg0: i32) -> (i32, i32) {
    %c0_i32 = arith.constant 0 : i32
    %c0_i32_0 = arith.constant 0 : i32
    %c0_i32_1 = arith.constant 0 : i32
    return %c0_i32, %c0_i32_0 : i32, i32
  }
  func.func @transform_4(%arg0: i32) -> (i32, i32, i32) {
    %c0_i32 = arith.constant 0 : i32
    %c0_i32_0 = arith.constant 0 : i32
    %c0_i32_1 = arith.constant 0 : i32
    %c0_i32_2 = arith.constant 0 : i32
    return %c0_i32, %c0_i32_0, %c0_i32_1 : i32, i32, i32
  }
  func.func @transform_5(%arg0: i32) -> (i32, i32, i32) {
    %c0_i32 = arith.constant 0 : i32
    %c0_i32_0 = arith.constant 0 : i32
    %c0_i32_1 = arith.constant 0 : i32
    %c0_i32_2 = arith.constant 0 : i32
    return %c0_i32, %c0_i32_0, %c0_i32_1 : i32, i32, i32
  }
  func.func @transform_6(%arg0: i32) -> (i32, i32) {
    %c0_i32 = arith.constant 0 : i32
    %c0_i32_0 = arith.constant 0 : i32
    %c0_i32_1 = arith.constant 0 : i32
    return %c0_i32, %c0_i32_0 : i32, i32
  }
  func.func @transform_7(%arg0: i32) -> (i32, i32) {
    %c0_i32 = arith.constant 0 : i32
    %c0_i32_0 = arith.constant 0 : i32
    %c0_i32_1 = arith.constant 0 : i32
    return %c0_i32, %c0_i32_0 : i32, i32
  }
  func.func @transform_8(%arg0: i32) -> (i32, i32) {
    %c0_i32 = arith.constant 0 : i32
    %c0_i32_0 = arith.constant 0 : i32
    %c0_i32_1 = arith.constant 0 : i32
    return %c0_i32, %c0_i32_0 : i32, i32
  }
}

</mosaic_0001>

<llo_original>
// kernel: hypergcn_forward.1
$region0: #{hypergcn_forward.1}
  #allocation0 [shape = 'u32[]', space=smem, size = 0x4, offset = 0x4, fixed_abs, tag = 'smem constant byte address 0x4 - core index']
  #allocation1 [shape = 'u32[144,128]{1,0:T(1,128)}', space=vmem, size = 0x12000, scoped, tag = 'internal scratch']
  %s0 = inlined_call_operand.vmem [shape: f32[16,8], index: 0, kind: input, shape index: {}]
  %s1 = inlined_call_operand.vmem [shape: f32[16,8], index: 1, kind: input, shape index: {}]
  %s2 = inlined_call_operand.vmem [shape: f32[8,32], index: 2, kind: input, shape index: {}]
  %s3 = inlined_call_operand.vmem [shape: f32[1,32], index: 3, kind: input, shape index: {}]
  %s4 = inlined_call_operand.vmem [shape: f32[2,32,32], index: 4, kind: input, shape index: {}]
  %s5 = inlined_call_operand.vmem [shape: f32[2,1,32], index: 5, kind: input, shape index: {}]
  %s6 = inlined_call_operand.vmem [shape: f32[32,128], index: 6, kind: input, shape index: {}]
  %s7 = inlined_call_operand.vmem [shape: f32[1,128], index: 7, kind: input, shape index: {}]
  %s8 = inlined_call_operand.vmem [shape: f32[16,128], index: 8, kind: output, shape index: {}]
  %s9 = sld [smem:[#allocation0]]
  $region42: #{hypergcn_forward.1} parent=0
    _
  %s11 = ssub.s32 1, %s9
  %s12 = scalar_select 0, %s11, %s9
  // Predicated region
  $region2: #{hypergcn_forward.1} parent=0 // pred_check
    _
  $region3: #{hypergcn_forward.1} parent=0 // pred_check_branch
    %14 = sbr.rel (0) target = $region5
  $region4: #{hypergcn_forward.1} parent=0 // pred_region
    _
  $region5: #{hypergcn_forward.1} parent=0 // pred_fallthru
    _
  // Predicated region
  $region6: #{hypergcn_forward.1} parent=0 // pred_check
    _
  $region7: #{hypergcn_forward.1} parent=0 // pred_check_branch
    %16 = sbr.rel (0) target = $region9
  $region8: #{hypergcn_forward.1} parent=0 // pred_region
    _
  $region9: #{hypergcn_forward.1} parent=0 // pred_fallthru
    _
  // Predicated region
  $region10: #{hypergcn_forward.1} parent=0 // pred_check
    _
  $region11: #{hypergcn_forward.1} parent=0 // pred_check_branch
    %18 = sbr.rel (0) target = $region13
  $region12: #{hypergcn_forward.1} parent=0 // pred_region
    _
  $region13: #{hypergcn_forward.1} parent=0 // pred_fallthru
    _
  // Predicated region
  $region14: #{hypergcn_forward.1} parent=0 // pred_check
    _
  $region15: #{hypergcn_forward.1} parent=0 // pred_check_branch
    %20 = sbr.rel (0) target = $region17
  $region16: #{hypergcn_forward.1} parent=0 // pred_region
    _
  $region17: #{hypergcn_forward.1} parent=0 // pred_fallthru
    _
  // Predicated region
  $region18: #{hypergcn_forward.1} parent=0 // pred_check
    _
  $region19: #{hypergcn_forward.1} parent=0 // pred_check_branch
    %22 = sbr.rel (0) target = $region21
  $region20: #{hypergcn_forward.1} parent=0 // pred_region
    _
  $region21: #{hypergcn_forward.1} parent=0 // pred_fallthru
    _
  // Predicated region
  $region22: #{hypergcn_forward.1} parent=0 // pred_check
    _
  $region23: #{hypergcn_forward.1} parent=0 // pred_check_branch
    %24 = sbr.rel (0) target = $region25
  $region24: #{hypergcn_forward.1} parent=0 // pred_region
    _
  $region25: #{hypergcn_forward.1} parent=0 // pred_fallthru
    _
  // Predicated region
  $region26: #{hypergcn_forward.1} parent=0 // pred_check
    _
  $region27: #{hypergcn_forward.1} parent=0 // pred_check_branch
    %26 = sbr.rel (0) target = $region29
  $region28: #{hypergcn_forward.1} parent=0 // pred_region
    _
  $region29: #{hypergcn_forward.1} parent=0 // pred_fallthru
    _
  // Predicated region
  $region30: #{hypergcn_forward.1} parent=0 // pred_check
    _
  $region31: #{hypergcn_forward.1} parent=0 // pred_check_branch
    %28 = sbr.rel (0) target = $region33
  $region32: #{hypergcn_forward.1} parent=0 // pred_region
    _
  $region33: #{hypergcn_forward.1} parent=0 // pred_fallthru
    _
  %v29 = vld [vmem:[%s1] sm:$0xff]
  %v30 = vld [vmem:[%s1 + $0x8] sm:$0xff]
  %vm31 = vcmask 64512
  %v32 = vsel %vm31, %v29, 0.0
  %33 = vadd.xlane.f32.xlu0 %v32
  %v34 = vpop.xlane.xlu0 %33
  %v35 = vsel %vm31, %v30, 0.0
  %36 = vadd.xlane.f32.xlu0 %v35
  %v37 = vpop.xlane.xlu0 %36
  %v38 = vmax.f32 %v34, 1.0
  %v39 = vmax.f32 %v37, 1.0
  %v40 = vadd.f32 %v32, %v35
  %v41 = vrot.slane %v40, 4
  %v42 = vadd.f32 %v40, %v41
  %v43 = vrot.slane %v42, 2
  %v44 = vadd.f32 %v42, %v43
  %v45 = vrot.slane %v44, 1
  %v46 = vadd.f32 %v44, %v45
  %v47 = vmax.f32 %v46, 1.0
  %v48 = vrcp.pop %v47
  %v49 = vmul.f32 1.0, %v48
  %v50 = vrsqrt.pop %v38
  %v51 = vmul.f32 %v38, %v50
  %vm52 = vcmp.eq.f32.partialorder %v38, inf
  %v53 = vsel %vm52, %v38, %v51
  %vm54 = vcmp.eq.f32.partialorder %v38, 0.0
  %v55 = vand.u32 %v38, 2147483648
  %v56 = vsel %vm54, %v55, %v53
  %v57 = vrsqrt.pop %v39
  %v58 = vmul.f32 %v39, %v57
  %vm59 = vcmp.eq.f32.partialorder %v39, inf
  %v60 = vsel %vm59, %v39, %v58
  %vm61 = vcmp.eq.f32.partialorder %v39, 0.0
  %v62 = vand.u32 %v39, 2147483648
  %v63 = vsel %vm61, %v62, %v60
  %v64 = vrcp.pop %v56
  %v65 = vmul.f32 1.0, %v64
  %v66 = vrcp.pop %v63
  %v67 = vmul.f32 1.0, %v66
  %v68 = vmul.f32 %v29, %v65
  %v69 = vmul.f32 %v30, %v67
  %v70 = vmul.f32 %v68, %v49
  %v71 = vmul.f32 %v69, %v49
  %v73 = vsel %vm31, %v70, 0
  %v76 = vsel %vm31, %v71, 0
  %v79 = vsel %vm31, %v68, 0
  %v82 = vsel %vm31, %v69, 0
  %84 = vmatprep.subr.mxu0 0.0
  %85 = vmatpush1.xpose.msra.mxu0 %v79
  %86 = vmatprep.subr.mxu0 0.0
  %87 = vmatpush1.xpose.msra.mxu0 %v82
  %88 = vmatprep.subr.mxu0 0.0
  %89 = vmatpush1.xpose.msra.mxu0 0.0
  %90 = vmatprep.subr.mxu0 0.0
  %91 = vmatpush1.xpose.msra.mxu0 0.0
  %92 = vmatprep.subr.mxu0 0.0
  %93 = vmatpush1.xpose.msra.mxu0 0.0
  %94 = vmatprep.subr.mxu0 0.0
  %95 = vmatpush1.xpose.msra.mxu0 0.0
  %96 = vmatprep.subr.mxu0 0.0
  %97 = vmatpush1.xpose.msra.mxu0 0.0
  %98 = vmatprep.subr.mxu0 0.0
  %99 = vmatpush1.xpose.msra.mxu0 0.0
  %100 = vmatprep.subr.mxu0 0.0
  %101 = vmatpush1.xpose.msra.mxu0 0.0
  %102 = vmatprep.subr.mxu0 0.0
  %103 = vmatpush1.xpose.msra.mxu0 0.0
  %104 = vmatprep.subr.mxu0 0.0
  %105 = vmatpush1.xpose.msra.mxu0 0.0
  %106 = vmatprep.subr.mxu0 0.0
  %107 = vmatpush1.xpose.msra.mxu0 0.0
  %108 = vmatprep.subr.mxu0 0.0
  %109 = vmatpush1.xpose.msra.mxu0 0.0
  %110 = vmatprep.subr.mxu0 0.0
  %111 = vmatpush1.xpose.msra.mxu0 0.0
  %112 = vmatprep.subr.mxu0 0.0
  %113 = vmatpush1.xpose.msra.mxu0 0.0
  %114 = vmatprep.subr.mxu0 0.0
  %115 = vmatpush1.xpose.msra.mxu0 0.0
  %116 = vmatprep.subr.mxu0 0.0
  %117 = vmatpush1.xpose.msra.mxu0 0.0
  %118 = vmatprep.subr.mxu0 0.0
  %119 = vmatpush1.xpose.msra.mxu0 0.0
  %120 = vmatprep.subr.mxu0 0.0
  %121 = vmatpush1.xpose.msra.mxu0 0.0
  %122 = vmatprep.subr.mxu0 0.0
  %123 = vmatpush1.xpose.msra.mxu0 0.0
  %124 = vmatprep.subr.mxu0 0.0
  %125 = vmatpush1.xpose.msra.mxu0 0.0
  %126 = vmatprep.subr.mxu0 0.0
  %127 = vmatpush1.xpose.msra.mxu0 0.0
  %128 = vmatprep.subr.mxu0 0.0
  %129 = vmatpush1.xpose.msra.mxu0 0.0
  %130 = vmatprep.subr.mxu0 0.0
  %131 = vmatpush1.xpose.msra.mxu0 0.0
  %132 = vmatprep.subr.mxu0 0.0
  %133 = vmatpush1.xpose.msra.mxu0 0.0
  %134 = vmatprep.subr.mxu0 0.0
  %135 = vmatpush1.xpose.msra.mxu0 0.0
  %136 = vmatprep.subr.mxu0 0.0
  %137 = vmatpush1.xpose.msra.mxu0 0.0
  %138 = vmatprep.subr.mxu0 0.0
  %139 = vmatpush1.xpose.msra.mxu0 0.0
  %140 = vmatprep.subr.mxu0 0.0
  %141 = vmatpush1.xpose.msra.mxu0 0.0
  %142 = vmatprep.subr.mxu0 0.0
  %143 = vmatpush1.xpose.msra.mxu0 0.0
  %144 = vmatprep.subr.mxu0 0.0
  %145 = vmatpush1.xpose.msra.mxu0 0.0
  %146 = vmatprep.subr.mxu0 0.0
  %147 = vmatpush1.xpose.msra.mxu0 0.0
  %148 = vmatprep.mubr.f32.mxu0 0.0
  %149 = vmatmul.mubr.f32.gmra.mrb[0].mxu0 %v73
  %v150 = vpop.f32.mrb[0].mxu0
  %v151 = vadd.f32 0.0, %v150
  %v152 = vpop.f32.mrb[0].mxu0
  %153 = vmatprep.mubr.f32.mxu0 0.0
  %154 = vmatmul.mubr.f32.gmra.mrb[0].mxu0 %v76
  %v155 = vpop.f32.mrb[0].mxu0
  %v156 = vadd.f32 0.0, %v155
  %v157 = vpop.f32.mrb[0].mxu0
  %158 = vdwg.mxu0
  %v159 = vld [vmem:[%s0] sm:$0xff]
  %v160 = vld [vmem:[%s0 + $0x8] sm:$0xff]
  %v161 = vld [vmem:[%s2] sm:$0xff]
  %v162 = vld [vmem:[%s3] sm:$0x1]
  %v164 = vlaneseq
  %v165 = vshrl.u32 %v164, 7
  %v166 = vsub.s32 0, %v165
  %v167 = vrot.slane %v162, %v166
  %v170 = vsel %vm31, %v159, 0
  %v173 = vsel %vm31, %v160, 0
  %175 = vmatprep.subr.mxu0 0.0
  %176 = vmatpush1.msra.mxu0 %v161
  %177 = vmatprep.subr.mxu0 0.0
  %178 = vmatpush1.msra.mxu0 0.0
  %179 = vmatprep.subr.mxu0 0.0
  %180 = vmatpush1.msra.mxu0 0.0
  %181 = vmatprep.subr.mxu0 0.0
  %182 = vmatpush1.msra.mxu0 0.0
  %183 = vmatprep.subr.mxu0 0.0
  %184 = vmatpush1.msra.mxu0 0.0
  %185 = vmatprep.subr.mxu0 0.0
  %186 = vmatpush1.msra.mxu0 0.0
  %187 = vmatprep.subr.mxu0 0.0
  %188 = vmatpush1.msra.mxu0 0.0
  %189 = vmatprep.subr.mxu0 0.0
  %190 = vmatpush1.msra.mxu0 0.0
  %191 = vmatprep.subr.mxu0 0.0
  %192 = vmatpush1.msra.mxu0 0.0
  %193 = vmatprep.subr.mxu0 0.0
  %194 = vmatpush1.msra.mxu0 0.0
  %195 = vmatprep.subr.mxu0 0.0
  %196 = vmatpush1.msra.mxu0 0.0
  %197 = vmatprep.subr.mxu0 0.0
  %198 = vmatpush1.msra.mxu0 0.0
  %199 = vmatprep.subr.mxu0 0.0
  %200 = vmatpush1.msra.mxu0 0.0
  %201 = vmatprep.subr.mxu0 0.0
  %202 = vmatpush1.msra.mxu0 0.0
  %203 = vmatprep.subr.mxu0 0.0
  %204 = vmatpush1.msra.mxu0 0.0
  %205 = vmatprep.subr.mxu0 0.0
  %206 = vmatpush1.msra.mxu0 0.0
  %207 = vmatprep.subr.mxu0 0.0
  %208 = vmatpush1.msra.mxu0 0.0
  %209 = vmatprep.subr.mxu0 0.0
  %210 = vmatpush1.msra.mxu0 0.0
  %211 = vmatprep.subr.mxu0 0.0
  %212 = vmatpush1.msra.mxu0 0.0
  %213 = vmatprep.subr.mxu0 0.0
  %214 = vmatpush1.msra.mxu0 0.0
  %215 = vmatprep.subr.mxu0 0.0
  %216 = vmatpush1.msra.mxu0 0.0
  %217 = vmatprep.subr.mxu0 0.0
  %218 = vmatpush1.msra.mxu0 0.0
  %219 = vmatprep.subr.mxu0 0.0
  %220 = vmatpush1.msra.mxu0 0.0
  %221 = vmatprep.subr.mxu0 0.0
  %222 = vmatpush1.msra.mxu0 0.0
  %223 = vmatprep.subr.mxu0 0.0
  %224 = vmatpush1.msra.mxu0 0.0
  %225 = vmatprep.subr.mxu0 0.0
  %226 = vmatpush1.msra.mxu0 0.0
  %227 = vmatprep.subr.mxu0 0.0
  %228 = vmatpush1.msra.mxu0 0.0
  %229 = vmatprep.subr.mxu0 0.0
  %230 = vmatpush1.msra.mxu0 0.0
  %231 = vmatprep.subr.mxu0 0.0
  %232 = vmatpush1.msra.mxu0 0.0
  %233 = vmatprep.subr.mxu0 0.0
  %234 = vmatpush1.msra.mxu0 0.0
  %235 = vmatprep.subr.mxu0 0.0
  %236 = vmatpush1.msra.mxu0 0.0
  %237 = vmatprep.subr.mxu0 0.0
  %238 = vmatpush1.msra.mxu0 0.0
  %239 = vmatprep.mubr.f32.mxu0 0.0
  %240 = vmatmul.mubr.f32.gmra.mrb[0].mxu0 %v170
  %v241 = vpop.f32.mrb[0].mxu0
  %v242 = vadd.f32 %v167, %v241
  %v243 = vpop.f32.mrb[0].mxu0
  %244 = vmatprep.mubr.f32.mxu0 0.0
  %245 = vmatmul.mubr.f32.gmra.mrb[0].mxu0 %v173
  %v246 = vpop.f32.mrb[0].mxu0
  %v247 = vadd.f32 %v167, %v246
  %v248 = vpop.f32.mrb[0].mxu0
  %249 = vdwg.mxu0
  %vm250 = vcmask 130048
  %v252 = vsel %vm250, %v151, 0
  %v255 = vsel %vm250, %v156, 0
  %257 = vmatprep.subr.mxu0 0.0
  %258 = vmatpush1.msra.mxu0 %v242
  %259 = vmatprep.subr.mxu0 0.0
  %260 = vmatpush1.msra.mxu0 %v247
  %261 = vmatprep.subr.mxu0 0.0
  %262 = vmatpush1.msra.mxu0 0.0
  %263 = vmatprep.subr.mxu0 0.0
  %264 = vmatpush1.msra.mxu0 0.0
  %265 = vmatprep.subr.mxu0 0.0
  %266 = vmatpush1.msra.mxu0 0.0
  %267 = vmatprep.subr.mxu0 0.0
  %268 = vmatpush1.msra.mxu0 0.0
  %269 = vmatprep.subr.mxu0 0.0
  %270 = vmatpush1.msra.mxu0 0.0
  %271 = vmatprep.subr.mxu0 0.0
  %272 = vmatpush1.msra.mxu0 0.0
  %273 = vmatprep.subr.mxu0 0.0
  %274 = vmatpush1.msra.mxu0 0.0
  %275 = vmatprep.subr.mxu0 0.0
  %276 = vmatpush1.msra.mxu0 0.0
  %277 = vmatprep.subr.mxu0 0.0
  %278 = vmatpush1.msra.mxu0 0.0
  %279 = vmatprep.subr.mxu0 0.0
  %280 = vmatpush1.msra.mxu0 0.0
  %281 = vmatprep.subr.mxu0 0.0
  %282 = vmatpush1.msra.mxu0 0.0
  %283 = vmatprep.subr.mxu0 0.0
  %284 = vmatpush1.msra.mxu0 0.0
  %285 = vmatprep.subr.mxu0 0.0
  %286 = vmatpush1.msra.mxu0 0.0
  %287 = vmatprep.subr.mxu0 0.0
  %288 = vmatpush1.msra.mxu0 0.0
  %289 = vmatprep.subr.mxu0 0.0
  %290 = vmatpush1.msra.mxu0 0.0
  %291 = vmatprep.subr.mxu0 0.0
  %292 = vmatpush1.msra.mxu0 0.0
  %293 = vmatprep.subr.mxu0 0.0
  %294 = vmatpush1.msra.mxu0 0.0
  %295 = vmatprep.subr.mxu0 0.0
  %296 = vmatpush1.msra.mxu0 0.0
  %297 = vmatprep.subr.mxu0 0.0
  %298 = vmatpush1.msra.mxu0 0.0
  %299 = vmatprep.subr.mxu0 0.0
  %300 = vmatpush1.msra.mxu0 0.0
  %301 = vmatprep.subr.mxu0 0.0
  %302 = vmatpush1.msra.mxu0 0.0
  %303 = vmatprep.subr.mxu0 0.0
  %304 = vmatpush1.msra.mxu0 0.0
  %305 = vmatprep.subr.mxu0 0.0
  %306 = vmatpush1.msra.mxu0 0.0
  %307 = vmatprep.subr.mxu0 0.0
  %308 = vmatpush1.msra.mxu0 0.0
  %309 = vmatprep.subr.mxu0 0.0
  %310 = vmatpush1.msra.mxu0 0.0
  %311 = vmatprep.subr.mxu0 0.0
  %312 = vmatpush1.msra.mxu0 0.0
  %313 = vmatprep.subr.mxu0 0.0
  %314 = vmatpush1.msra.mxu0 0.0
  %315 = vmatprep.subr.mxu0 0.0
  %316 = vmatpush1.msra.mxu0 0.0
  %317 = vmatprep.subr.mxu0 0.0
  %318 = vmatpush1.msra.mxu0 0.0
  %319 = vmatprep.subr.mxu0 0.0
  %320 = vmatpush1.msra.mxu0 0.0
  %321 = vmatprep.mubr.f32.mxu0 0.0
  %322 = vmatmul.mubr.f32.gmra.mrb[0].mxu0 %v252
  %v323 = vpop.f32.mrb[0].mxu0
  %v324 = vadd.f32 0.0, %v323
  %v325 = vpop.f32.mrb[0].mxu0
  %326 = vmatprep.mubr.f32.mxu0 0.0
  %327 = vmatmul.mubr.f32.gmra.mrb[0].mxu0 %v255
  %v328 = vpop.f32.mrb[0].mxu0
  %v329 = vadd.f32 0.0, %v328
  %v330 = vpop.f32.mrb[0].mxu0
  %331 = vdwg.mxu0
  %v332 = vld [vmem:[%s4] sm:$0xff]
  %v333 = vld [vmem:[%s4 + $0x8] sm:$0xff]
  %v334 = vld [vmem:[%s4 + $0x10] sm:$0xff]
  %v335 = vld [vmem:[%s4 + $0x18] sm:$0xff]
  %v336 = vld [vmem:[%s5] sm:$0x1]
  %v338 = vlaneseq
  %v339 = vshrl.u32 %v338, 7
  %v340 = vsub.s32 0, %v339
  %v341 = vrot.slane %v336, %v340
  %vm343 = vcmask 261120
  %v345 = vsel %vm343, %v324, 0
  %v348 = vsel %vm343, %v329, 0
  %350 = vmatprep.subr.mxu0 0.0
  %351 = vmatpush1.msra.mxu0 %v332
  %352 = vmatprep.subr.mxu0 0.0
  %353 = vmatpush1.msra.mxu0 %v333
  %354 = vmatprep.subr.mxu0 0.0
  %355 = vmatpush1.msra.mxu0 %v334
  %356 = vmatprep.subr.mxu0 0.0
  %357 = vmatpush1.msra.mxu0 %v335
  %358 = vmatprep.subr.mxu0 0.0
  %359 = vmatpush1.msra.mxu0 0.0
  %360 = vmatprep.subr.mxu0 0.0
  %361 = vmatpush1.msra.mxu0 0.0
  %362 = vmatprep.subr.mxu0 0.0
  %363 = vmatpush1.msra.mxu0 0.0
  %364 = vmatprep.subr.mxu0 0.0
  %365 = vmatpush1.msra.mxu0 0.0
  %366 = vmatprep.subr.mxu0 0.0
  %367 = vmatpush1.msra.mxu0 0.0
  %368 = vmatprep.subr.mxu0 0.0
  %369 = vmatpush1.msra.mxu0 0.0
  %370 = vmatprep.subr.mxu0 0.0
  %371 = vmatpush1.msra.mxu0 0.0
  %372 = vmatprep.subr.mxu0 0.0
  %373 = vmatpush1.msra.mxu0 0.0
  %374 = vmatprep.subr.mxu0 0.0
  %375 = vmatpush1.msra.mxu0 0.0
  %376 = vmatprep.subr.mxu0 0.0
  %377 = vmatpush1.msra.mxu0 0.0
  %378 = vmatprep.subr.mxu0 0.0
  %379 = vmatpush1.msra.mxu0 0.0
  %380 = vmatprep.subr.mxu0 0.0
  %381 = vmatpush1.msra.mxu0 0.0
  %382 = vmatprep.subr.mxu0 0.0
  %383 = vmatpush1.msra.mxu0 0.0
  %384 = vmatprep.subr.mxu0 0.0
  %385 = vmatpush1.msra.mxu0 0.0
  %386 = vmatprep.subr.mxu0 0.0
  %387 = vmatpush1.msra.mxu0 0.0
  %388 = vmatprep.subr.mxu0 0.0
  %389 = vmatpush1.msra.mxu0 0.0
  %390 = vmatprep.subr.mxu0 0.0
  %391 = vmatpush1.msra.mxu0 0.0
  %392 = vmatprep.subr.mxu0 0.0
  %393 = vmatpush1.msra.mxu0 0.0
  %394 = vmatprep.subr.mxu0 0.0
  %395 = vmatpush1.msra.mxu0 0.0
  %396 = vmatprep.subr.mxu0 0.0
  %397 = vmatpush1.msra.mxu0 0.0
  %398 = vmatprep.subr.mxu0 0.0
  %399 = vmatpush1.msra.mxu0 0.0
  %400 = vmatprep.subr.mxu0 0.0
  %401 = vmatpush1.msra.mxu0 0.0
  %402 = vmatprep.subr.mxu0 0.0
  %403 = vmatpush1.msra.mxu0 0.0
  %404 = vmatprep.subr.mxu0 0.0
  %405 = vmatpush1.msra.mxu0 0.0
  %406 = vmatprep.subr.mxu0 0.0
  %407 = vmatpush1.msra.mxu0 0.0
  %408 = vmatprep.subr.mxu0 0.0
  %409 = vmatpush1.msra.mxu0 0.0
  %410 = vmatprep.subr.mxu0 0.0
  %411 = vmatpush1.msra.mxu0 0.0
  %412 = vmatprep.subr.mxu0 0.0
  %413 = vmatpush1.msra.mxu0 0.0
  %414 = vmatprep.mubr.f32.mxu0 0.0
  %415 = vmatmul.mubr.f32.gmra.mrb[0].mxu0 %v345
  %v416 = vpop.f32.mrb[0].mxu0
  %v417 = vadd.f32 %v341, %v416
  %v418 = vpop.f32.mrb[0].mxu0
  %419 = vmatprep.mubr.f32.mxu0 0.0
  %420 = vmatmul.mubr.f32.gmra.mrb[0].mxu0 %v348
  %v421 = vpop.f32.mrb[0].mxu0
  %v422 = vadd.f32 %v341, %v421
  %v423 = vpop.f32.mrb[0].mxu0
  %424 = vdwg.mxu0
  %v425 = vmax.f32 %v417, 0.0
  %v426 = vmax.f32 %v422, 0.0
  %427 = vmatprep.subr.mxu0 0.0
  %428 = vmatpush1.msra.mxu0 %v425
  %429 = vmatprep.subr.mxu0 0.0
  %430 = vmatpush1.msra.mxu0 %v426
  %431 = vmatprep.subr.mxu0 0.0
  %432 = vmatpush1.msra.mxu0 0.0
  %433 = vmatprep.subr.mxu0 0.0
  %434 = vmatpush1.msra.mxu0 0.0
  %435 = vmatprep.subr.mxu0 0.0
  %436 = vmatpush1.msra.mxu0 0.0
  %437 = vmatprep.subr.mxu0 0.0
  %438 = vmatpush1.msra.mxu0 0.0
  %439 = vmatprep.subr.mxu0 0.0
  %440 = vmatpush1.msra.mxu0 0.0
  %441 = vmatprep.subr.mxu0 0.0
  %442 = vmatpush1.msra.mxu0 0.0
  %443 = vmatprep.subr.mxu0 0.0
  %444 = vmatpush1.msra.mxu0 0.0
  %445 = vmatprep.subr.mxu0 0.0
  %446 = vmatpush1.msra.mxu0 0.0
  %447 = vmatprep.subr.mxu0 0.0
  %448 = vmatpush1.msra.mxu0 0.0
  %449 = vmatprep.subr.mxu0 0.0
  %450 = vmatpush1.msra.mxu0 0.0
  %451 = vmatprep.subr.mxu0 0.0
  %452 = vmatpush1.msra.mxu0 0.0
  %453 = vmatprep.subr.mxu0 0.0
  %454 = vmatpush1.msra.mxu0 0.0
  %455 = vmatprep.subr.mxu0 0.0
  %456 = vmatpush1.msra.mxu0 0.0
  %457 = vmatprep.subr.mxu0 0.0
  %458 = vmatpush1.msra.mxu0 0.0
  %459 = vmatprep.subr.mxu0 0.0
  %460 = vmatpush1.msra.mxu0 0.0
  %461 = vmatprep.subr.mxu0 0.0
  %462 = vmatpush1.msra.mxu0 0.0
  %463 = vmatprep.subr.mxu0 0.0
  %464 = vmatpush1.msra.mxu0 0.0
  %465 = vmatprep.subr.mxu0 0.0
  %466 = vmatpush1.msra.mxu0 0.0
  %467 = vmatprep.subr.mxu0 0.0
  %468 = vmatpush1.msra.mxu0 0.0
  %469 = vmatprep.subr.mxu0 0.0
  %470 = vmatpush1.msra.mxu0 0.0
  %471 = vmatprep.subr.mxu0 0.0
  %472 = vmatpush1.msra.mxu0 0.0
  %473 = vmatprep.subr.mxu0 0.0
  %474 = vmatpush1.msra.mxu0 0.0
  %475 = vmatprep.subr.mxu0 0.0
  %476 = vmatpush1.msra.mxu0 0.0
  %477 = vmatprep.subr.mxu0 0.0
  %478 = vmatpush1.msra.mxu0 0.0
  %479 = vmatprep.subr.mxu0 0.0
  %480 = vmatpush1.msra.mxu0 0.0
  %481 = vmatprep.subr.mxu0 0.0
  %482 = vmatpush1.msra.mxu0 0.0
  %483 = vmatprep.subr.mxu0 0.0
  %484 = vmatpush1.msra.mxu0 0.0
  %485 = vmatprep.subr.mxu0 0.0
  %486 = vmatpush1.msra.mxu0 0.0
  %487 = vmatprep.subr.mxu0 0.0
  %488 = vmatpush1.msra.mxu0 0.0
  %489 = vmatprep.subr.mxu0 0.0
  %490 = vmatpush1.msra.mxu0 0.0
  %491 = vmatprep.mubr.f32.mxu0 0.0
  %492 = vmatmul.mubr.f32.gmra.mrb[0].mxu0 %v252
  %v493 = vpop.f32.mrb[0].mxu0
  %v494 = vadd.f32 0.0, %v493
  %v495 = vpop.f32.mrb[0].mxu0
  %496 = vmatprep.mubr.f32.mxu0 0.0
  %497 = vmatmul.mubr.f32.gmra.mrb[0].mxu0 %v255
  %v498 = vpop.f32.mrb[0].mxu0
  %v499 = vadd.f32 0.0, %v498
  %v500 = vpop.f32.mrb[0].mxu0
  %501 = vdwg.mxu0
  %s502 = scalar_lea.vmem %s4, 32
  %v503 = vld [vmem:[%s502] sm:$0xff]
  %v504 = vld [vmem:[%s502 + $0x8] sm:$0xff]
  %v505 = vld [vmem:[%s502 + $0x10] sm:$0xff]
  %v506 = vld [vmem:[%s502 + $0x18] sm:$0xff]
  %s507 = scalar_lea.vmem %s5, 1
  %v508 = vld [vmem:[%s507] sm:$0x1]
  %v510 = vlaneseq
  %v511 = vshrl.u32 %v510, 7
  %v512 = vsub.s32 0, %v511
  %v513 = vrot.slane %v508, %v512
  %v516 = vsel %vm343, %v494, 0
  %v519 = vsel %vm343, %v499, 0
  %521 = vmatprep.subr.mxu0 0.0
  %522 = vmatpush1.msra.mxu0 %v503
  %523 = vmatprep.subr.mxu0 0.0
  %524 = vmatpush1.msra.mxu0 %v504
  %525 = vmatprep.subr.mxu0 0.0
  %526 = vmatpush1.msra.mxu0 %v505
  %527 = vmatprep.subr.mxu0 0.0
  %528 = vmatpush1.msra.mxu0 %v506
  %529 = vmatprep.subr.mxu0 0.0
  %530 = vmatpush1.msra.mxu0 0.0
  %531 = vmatprep.subr.mxu0 0.0
  %532 = vmatpush1.msra.mxu0 0.0
  %533 = vmatprep.subr.mxu0 0.0
  %534 = vmatpush1.msra.mxu0 0.0
  %535 = vmatprep.subr.mxu0 0.0
  %536 = vmatpush1.msra.mxu0 0.0
  %537 = vmatprep.subr.mxu0 0.0
  %538 = vmatpush1.msra.mxu0 0.0
  %539 = vmatprep.subr.mxu0 0.0
  %540 = vmatpush1.msra.mxu0 0.0
  %541 = vmatprep.subr.mxu0 0.0
  %542 = vmatpush1.msra.mxu0 0.0
  %543 = vmatprep.subr.mxu0 0.0
  %544 = vmatpush1.msra.mxu0 0.0
  %545 = vmatprep.subr.mxu0 0.0
  %546 = vmatpush1.msra.mxu0 0.0
  %547 = vmatprep.subr.mxu0 0.0
  %548 = vmatpush1.msra.mxu0 0.0
  %549 = vmatprep.subr.mxu0 0.0
  %550 = vmatpush1.msra.mxu0 0.0
  %551 = vmatprep.subr.mxu0 0.0
  %552 = vmatpush1.msra.mxu0 0.0
  %553 = vmatprep.subr.mxu0 0.0
  %554 = vmatpush1.msra.mxu0 0.0
  %555 = vmatprep.subr.mxu0 0.0
  %556 = vmatpush1.msra.mxu0 0.0
  %557 = vmatprep.subr.mxu0 0.0
  %558 = vmatpush1.msra.mxu0 0.0
  %559 = vmatprep.subr.mxu0 0.0
  %560 = vmatpush1.msra.mxu0 0.0
  %561 = vmatprep.subr.mxu0 0.0
  %562 = vmatpush1.msra.mxu0 0.0
  %563 = vmatprep.subr.mxu0 0.0
  %564 = vmatpush1.msra.mxu0 0.0
  %565 = vmatprep.subr.mxu0 0.0
  %566 = vmatpush1.msra.mxu0 0.0
  %567 = vmatprep.subr.mxu0 0.0
  %568 = vmatpush1.msra.mxu0 0.0
  %569 = vmatprep.subr.mxu0 0.0
  %570 = vmatpush1.msra.mxu0 0.0
  %571 = vmatprep.subr.mxu0 0.0
  %572 = vmatpush1.msra.mxu0 0.0
  %573 = vmatprep.subr.mxu0 0.0
  %574 = vmatpush1.msra.mxu0 0.0
  %575 = vmatprep.subr.mxu0 0.0
  %576 = vmatpush1.msra.mxu0 0.0
  %577 = vmatprep.subr.mxu0 0.0
  %578 = vmatpush1.msra.mxu0 0.0
  %579 = vmatprep.subr.mxu0 0.0
  %580 = vmatpush1.msra.mxu0 0.0
  %581 = vmatprep.subr.mxu0 0.0
  %582 = vmatpush1.msra.mxu0 0.0
  %583 = vmatprep.subr.mxu0 0.0
  %584 = vmatpush1.msra.mxu0 0.0
  %585 = vmatprep.mubr.f32.mxu0 0.0
  %586 = vmatmul.mubr.f32.gmra.mrb[0].mxu0 %v516
  %v587 = vpop.f32.mrb[0].mxu0
  %v588 = vadd.f32 %v513, %v587
  %v589 = vpop.f32.mrb[0].mxu0
  %590 = vmatprep.mubr.f32.mxu0 0.0
  %591 = vmatmul.mubr.f32.gmra.mrb[0].mxu0 %v519
  %v592 = vpop.f32.mrb[0].mxu0
  %v593 = vadd.f32 %v513, %v592
  %v594 = vpop.f32.mrb[0].mxu0
  %595 = vdwg.mxu0
  %v596 = vmax.f32 %v588, 0.0
  %v597 = vmax.f32 %v593, 0.0
  %v598 = vld [vmem:[%s6] sm:$0xff]
  %v599 = vld [vmem:[%s6 + $0x8] sm:$0xff]
  %v600 = vld [vmem:[%s6 + $0x10] sm:$0xff]
  %v601 = vld [vmem:[%s6 + $0x18] sm:$0xff]
  %v602 = vld [vmem:[%s7] sm:$0x1]
  %v604 = vlaneseq
  %v605 = vshrl.u32 %v604, 7
  %v606 = vsub.s32 0, %v605
  %v607 = vrot.slane %v602, %v606
  %v610 = vsel %vm343, %v596, 0
  %v613 = vsel %vm343, %v597, 0
  %615 = vmatprep.subr.mxu0 0.0
  %616 = vmatpush1.msra.mxu0 %v598
  %617 = vmatprep.subr.mxu0 0.0
  %618 = vmatpush1.msra.mxu0 %v599
  %619 = vmatprep.subr.mxu0 0.0
  %620 = vmatpush1.msra.mxu0 %v600
  %621 = vmatprep.subr.mxu0 0.0
  %622 = vmatpush1.msra.mxu0 %v601
  %623 = vmatprep.subr.mxu0 0.0
  %624 = vmatpush1.msra.mxu0 0.0
  %625 = vmatprep.subr.mxu0 0.0
  %626 = vmatpush1.msra.mxu0 0.0
  %627 = vmatprep.subr.mxu0 0.0
  %628 = vmatpush1.msra.mxu0 0.0
  %629 = vmatprep.subr.mxu0 0.0
  %630 = vmatpush1.msra.mxu0 0.0
  %631 = vmatprep.subr.mxu0 0.0
  %632 = vmatpush1.msra.mxu0 0.0
  %633 = vmatprep.subr.mxu0 0.0
  %634 = vmatpush1.msra.mxu0 0.0
  %635 = vmatprep.subr.mxu0 0.0
  %636 = vmatpush1.msra.mxu0 0.0
  %637 = vmatprep.subr.mxu0 0.0
  %638 = vmatpush1.msra.mxu0 0.0
  %639 = vmatprep.subr.mxu0 0.0
  %640 = vmatpush1.msra.mxu0 0.0
  %641 = vmatprep.subr.mxu0 0.0
  %642 = vmatpush1.msra.mxu0 0.0
  %643 = vmatprep.subr.mxu0 0.0
  %644 = vmatpush1.msra.mxu0 0.0
  %645 = vmatprep.subr.mxu0 0.0
  %646 = vmatpush1.msra.mxu0 0.0
  %647 = vmatprep.subr.mxu0 0.0
  %648 = vmatpush1.msra.mxu0 0.0
  %649 = vmatprep.subr.mxu0 0.0
  %650 = vmatpush1.msra.mxu0 0.0
  %651 = vmatprep.subr.mxu0 0.0
  %652 = vmatpush1.msra.mxu0 0.0
  %653 = vmatprep.subr.mxu0 0.0
  %654 = vmatpush1.msra.mxu0 0.0
  %655 = vmatprep.subr.mxu0 0.0
  %656 = vmatpush1.msra.mxu0 0.0
  %657 = vmatprep.subr.mxu0 0.0
  %658 = vmatpush1.msra.mxu0 0.0
  %659 = vmatprep.subr.mxu0 0.0
  %660 = vmatpush1.msra.mxu0 0.0
  %661 = vmatprep.subr.mxu0 0.0
  %662 = vmatpush1.msra.mxu0 0.0
  %663 = vmatprep.subr.mxu0 0.0
  %664 = vmatpush1.msra.mxu0 0.0
  %665 = vmatprep.subr.mxu0 0.0
  %666 = vmatpush1.msra.mxu0 0.0
  %667 = vmatprep.subr.mxu0 0.0
  %668 = vmatpush1.msra.mxu0 0.0
  %669 = vmatprep.subr.mxu0 0.0
  %670 = vmatpush1.msra.mxu0 0.0
  %671 = vmatprep.subr.mxu0 0.0
  %672 = vmatpush1.msra.mxu0 0.0
  %673 = vmatprep.subr.mxu0 0.0
  %674 = vmatpush1.msra.mxu0 0.0
  %675 = vmatprep.subr.mxu0 0.0
  %676 = vmatpush1.msra.mxu0 0.0
  %677 = vmatprep.subr.mxu0 0.0
  %678 = vmatpush1.msra.mxu0 0.0
  %679 = vmatprep.mubr.f32.mxu0 0.0
  %680 = vmatmul.mubr.f32.gmra.mrb[0].mxu0 %v610
  %v681 = vpop.f32.mrb[0].mxu0
  %v682 = vadd.f32 %v607, %v681
  %v683 = vpop.f32.mrb[0].mxu0
  %684 = vmatprep.mubr.f32.mxu0 0.0
  %685 = vmatmul.mubr.f32.gmra.mrb[0].mxu0 %v613
  %v686 = vpop.f32.mrb[0].mxu0
  %v687 = vadd.f32 %v607, %v686
  %v688 = vpop.f32.mrb[0].mxu0
  %689 = vdwg.mxu0
  %690 = vst [vmem:[%s8] sm:$0xff] %v682
  %691 = vst [vmem:[%s8 + $0x8] sm:$0xff] %v687
  // Predicated region
  $region34: #{hypergcn_forward.1} parent=0 // pred_check
    _
  $region35: #{hypergcn_forward.1} parent=0 // pred_check_branch
    %693 = sbr.rel (0) target = $region37
  $region36: #{hypergcn_forward.1} parent=0 // pred_region
    _
  $region37: #{hypergcn_forward.1} parent=0 // pred_fallthru
    _
  // Predicated region
  $region38: #{hypergcn_forward.1} parent=0 // pred_check
    _
  $region39: #{hypergcn_forward.1} parent=0 // pred_check_branch
    %695 = sbr.rel (0) target = $region41
  $region40: #{hypergcn_forward.1} parent=0 // pred_region
    _
  $region41: #{hypergcn_forward.1} parent=0 // pred_fallthru
    _

</llo_original>
